<compile_context>
chip_gen: v6e
topology: v6e:2x2x1
jax: 0.10.0
libtpu: 0.0.40
codegen_flags: <defaults>
</compile_context>

<pallas_src>
import jax
import jax.numpy as jnp
from jax.experimental import pallas as pl
from jax.experimental.pallas import tpu as pltpu

# ----- small, deterministic config -----
B = 2       # batch
S = 8       # sequence length (pad_size)
H = 32      # bert hidden size
F = 16      # num_filters
C = 10      # num_classes
VOCAB = 64


def dpcnn_kernel(enc_ref, wr_ref, br_ref, wc_ref, bc_ref, wf_ref, bf_ref, out_ref):
    enc = enc_ref[...].astype(jnp.float32)          # (B, S, H) -- whole batch, one step
    Bb = enc.shape[0]

    wr = wr_ref[...]                                # (3H, F) fused conv_region weight
    br = br_ref[...]                                # (1, F)
    wc = wc_ref[...]                                # (3F, F) fused conv weight
    bc = bc_ref[...]                                # (1, F)

    def relu(x):
        return jnp.maximum(x, 0.0)

    def pad1(x):                                    # ZeroPad2d((0,0,1,1)) along seq
        z = jnp.zeros((Bb, 1, x.shape[2]), jnp.float32)
        return jnp.concatenate([z, x, z], axis=1)

    def pad2(x):                                    # ZeroPad2d((0,0,0,1)) along seq
        z = jnp.zeros((Bb, 1, x.shape[2]), jnp.float32)
        return jnp.concatenate([x, z], axis=1)

    def fused_conv3(xp, w, bias):
        # Valid 3-tap conv along seq.  xp: (B, Lin, D); w: (3D, F) with the 3 taps
        # stacked along the contraction dim.  The 3 shifted inputs are concatenated
        # on the lane axis and all batch rows are stacked on the sublane axis, so
        # the whole layer is ONE MXU matmul (was one per batch row).
        Lin, D = xp.shape[1], xp.shape[2]
        L = Lin - 2
        cat = jnp.concatenate(
            [xp[:, 0:L], xp[:, 1:L + 1], xp[:, 2:L + 2]], axis=-1)     # (B, L, 3D)
        flat = jnp.concatenate([cat[b] for b in range(Bb)], axis=0)    # (B*L, 3D)
        y = jnp.dot(flat, w, preferred_element_type=jnp.float32) + bias
        return jnp.stack([y[b * L:(b + 1) * L] for b in range(Bb)], axis=0)   # (B, L, F)

    def max_pool(x):
        # MaxPool2d((3,1), stride=2): vectorized sliding-window max over full
        # slices, then a small stride-2 row selection.
        Lp = x.shape[1]
        Lo = (Lp - 3) // 2 + 1
        Lw = Lp - 2
        m = jnp.maximum(jnp.maximum(x[:, 0:Lw], x[:, 1:Lw + 1]), x[:, 2:Lw + 2])
        if Lo == 1:
            return m[:, 0:1]
        return jnp.concatenate([m[:, 2 * i:2 * i + 1] for i in range(Lo)], axis=1)

    def block(x):
        px = max_pool(pad2(x))
        # relu(pad1(.)) == pad1(relu(.)) since relu(0) == 0; matches torch order.
        y = fused_conv3(pad1(relu(px)), wc, bc)
        y = fused_conv3(pad1(relu(y)), wc, bc)
        return y + px

    x = fused_conv3(enc, wr, br)                    # conv_region: (B, S-2, F)
    x = fused_conv3(pad1(relu(x)), wc, bc)
    x = fused_conv3(pad1(relu(x)), wc, bc)
    while x.shape[1] > 2:                           # static shapes -> unrolled at trace time
        x = block(x)
    assert x.shape[1] == 1, "chosen pad_size must reduce to a single row (matches torch squeeze)"

    feat = jnp.concatenate([x[b] for b in range(Bb)], axis=0)          # (B, F)
    out = jnp.dot(feat, wf_ref[...], preferred_element_type=jnp.float32) + bf_ref[...]
    out_ref[...] = out.astype(out_ref.dtype)        # single full (B, C) store


def dpcnn_forward(enc, wr, br, wc, bc, wf, bf):
    b, s, h = enc.shape
    f = wr.shape[2]
    c = wf.shape[1]
    # Pre-concatenate the 3 conv taps along the contraction dim (tap-major, row-major
    # reshape), matching the kernel's lane-axis input concat.
    wr_cat = wr.reshape(3 * h, f)                   # (3H, F)
    wc_cat = wc.reshape(3 * f, f)                   # (3F, F)
    vmem = pl.BlockSpec(memory_space=pltpu.MemorySpace.VMEM)
    # Single grid step over the whole batch: total working set is a few KB, far under
    # the VMEM budget on every TPU generation, so no tiling is needed.
    return pl.pallas_call(
        dpcnn_kernel,
        out_shape=jax.ShapeDtypeStruct((b, c), jnp.float32),
        in_specs=[vmem] * 7,
        out_specs=vmem,
    )(enc, wr_cat, br, wc_cat, bc, wf, bf)


def reference_forward(enc, wr, br, wc, bc, wf, bf):
    """Pure-JAX reference mirroring the PyTorch forward (per batch, unfused weights)."""
    def conv_region(x):
        L = x.shape[0] - 2
        return sum(x[k:k + L] @ wr[k] for k in range(3)) + br
    def conv3(x):
        L = x.shape[0] - 2
        return sum(x[k:k + L] @ wc[k] for k in range(3)) + bc
    pad1 = lambda x: jnp.pad(x, ((1, 1), (0, 0)))
    pad2 = lambda x: jnp.pad(x, ((0, 1), (0, 0)))
    relu = lambda x: jnp.maximum(x, 0.0)
    def max_pool(x):
        Lo = (x.shape[0] - 3) // 2 + 1
        return jnp.stack([x[2 * i:2 * i + 3].max(axis=0) for i in range(Lo)], axis=0)
    def block(x):
        px = max_pool(pad2(x))
        y = conv3(relu(pad1(px)))
        y = conv3(relu(pad1(y)))
        return y + px
    outs = []
    for b in range(enc.shape[0]):
        x = conv_region(enc[b])
        x = conv3(relu(pad1(x)))
        x = conv3(relu(pad1(x)))
        while x.shape[0] > 2:
            x = block(x)
        outs.append((x @ wf + bf)[0])
    return jnp.stack(outs, axis=0)


if __name__ == "__main__":
    key = jax.random.PRNGKey(0)
    k_ctx, k_emb, k_wr, k_br, k_wc, k_bc, k_wf, k_bf = jax.random.split(key, 8)

    # Inputs mimicking x = (context_ids, segment_ids, attention_mask)
    context = jax.random.randint(k_ctx, (B, S), 0, VOCAB)
    mask = jnp.ones((B, S), jnp.float32).at[1, 6:].set(0.0)   # ragged mask for batch 1

    # BERT stub (deterministic): embedding lookup masked by attention mask.
    emb_table = jax.random.normal(k_emb, (VOCAB, H), jnp.float32) * 0.5
    encoder_out = emb_table[context] * mask[..., None]        # (B, S, H)

    # DPCNN parameters (PyTorch shapes re-laid-out for [L, F] kernel layout):
    #   conv_region (F,1,3,H) -> wr (3,H,F);  conv (F,F,3,1) -> wc (3,F,F);  fc (C,F) -> wf (F,C)
    wr = jax.random.normal(k_wr, (3, H, F), jnp.float32) * 0.1
    br = jax.random.normal(k_br, (1, F), jnp.float32) * 0.1
    wc = jax.random.normal(k_wc, (3, F, F), jnp.float32) * 0.1
    bc = jax.random.normal(k_bc, (1, F), jnp.float32) * 0.1
    wf = jax.random.normal(k_wf, (F, C), jnp.float32) * 0.1
    bf = jax.random.normal(k_bf, (1, C), jnp.float32) * 0.1

    out = dpcnn_forward(encoder_out, wr, br, wc, bc, wf, bf)
    out = jax.block_until_ready(out)

    ref = reference_forward(encoder_out, wr, br, wc, bc, wf, bf)
    assert out.shape == (B, C)
    assert jnp.allclose(out, ref, atol=5e-4, rtol=5e-4), (out, ref)
    print("KERNEL_OK")
</pallas_src>

<mosaic_0001>
module attributes {stable_mosaic.version = 11 : i64} {
  func.func @dpcnn_kernel(%arg0: memref<2x8x32xf32, #tpu.memory_space<vmem>>, %arg1: memref<96x16xf32, #tpu.memory_space<vmem>>, %arg2: memref<1x16xf32, #tpu.memory_space<vmem>>, %arg3: memref<48x16xf32, #tpu.memory_space<vmem>>, %arg4: memref<1x16xf32, #tpu.memory_space<vmem>>, %arg5: memref<16x10xf32, #tpu.memory_space<vmem>>, %arg6: memref<1x10xf32, #tpu.memory_space<vmem>>, %arg7: memref<2x10xf32, #tpu.memory_space<vmem>>) attributes {dimension_semantics = [], scalar_prefetch = 0 : i64, scratch_operands = 0 : i64, tpu.core_type = #tpu.core_type<tc>} {
    %c0 = arith.constant 0 : index
    %c0_0 = arith.constant 0 : index
    %c0_1 = arith.constant 0 : index
    %0 = vector.load %arg0[%c0, %c0_0, %c0_1] : memref<2x8x32xf32, #tpu.memory_space<vmem>>, vector<2x8x32xf32>
    %c0_2 = arith.constant 0 : index
    %c0_3 = arith.constant 0 : index
    %1 = vector.load %arg1[%c0_2, %c0_3] : memref<96x16xf32, #tpu.memory_space<vmem>>, vector<96x16xf32>
    %c0_4 = arith.constant 0 : index
    %c0_5 = arith.constant 0 : index
    %2 = vector.load %arg2[%c0_4, %c0_5] : memref<1x16xf32, #tpu.memory_space<vmem>>, vector<1x16xf32>
    %c0_6 = arith.constant 0 : index
    %c0_7 = arith.constant 0 : index
    %3 = vector.load %arg3[%c0_6, %c0_7] : memref<48x16xf32, #tpu.memory_space<vmem>>, vector<48x16xf32>
    %c0_8 = arith.constant 0 : index
    %c0_9 = arith.constant 0 : index
    %4 = vector.load %arg4[%c0_8, %c0_9] : memref<1x16xf32, #tpu.memory_space<vmem>>, vector<1x16xf32>
    %5 = vector.extract_strided_slice %0 {offsets = [0, 0, 0], sizes = [2, 6, 32], strides = [1, 1, 1]} : vector<2x8x32xf32> to vector<2x6x32xf32>
    %6 = vector.extract_strided_slice %0 {offsets = [0, 1, 0], sizes = [2, 6, 32], strides = [1, 1, 1]} : vector<2x8x32xf32> to vector<2x6x32xf32>
    %7 = vector.extract_strided_slice %0 {offsets = [0, 2, 0], sizes = [2, 6, 32], strides = [1, 1, 1]} : vector<2x8x32xf32> to vector<2x6x32xf32>
    %8 = tpu.concatenate %5, %6, %7 in 2 : vector<2x6x32xf32>, vector<2x6x32xf32>, vector<2x6x32xf32> -> vector<2x6x96xf32>
    %9 = vector.extract_strided_slice %8 {offsets = [0, 0, 0], sizes = [1, 6, 96], strides = [1, 1, 1]} : vector<2x6x96xf32> to vector<1x6x96xf32>
    %10 = vector.shape_cast %9 : vector<1x6x96xf32> to vector<6x96xf32>
    %11 = vector.extract_strided_slice %8 {offsets = [1, 0, 0], sizes = [1, 6, 96], strides = [1, 1, 1]} : vector<2x6x96xf32> to vector<1x6x96xf32>
    %12 = vector.shape_cast %11 : vector<1x6x96xf32> to vector<6x96xf32>
    %13 = tpu.concatenate %10, %12 in 0 : vector<6x96xf32>, vector<6x96xf32> -> vector<12x96xf32>
    %cst = arith.constant dense<0.000000e+00> : vector<12x16xf32>
    %14 = tpu.matmul %13, %1, %cst {dimension_numbers = #tpu.dot_dimension_numbers<[1], [0], [0], [1], [0, 0, 1, 1], [], []>} : vector<12x96xf32>, vector<96x16xf32>, vector<12x16xf32> -> vector<12x16xf32>
    %15 = vector.broadcast %2 : vector<1x16xf32> to vector<12x16xf32>
    %16 = arith.addf %14, %15 : vector<12x16xf32>
    %17 = vector.extract_strided_slice %16 {offsets = [0, 0], sizes = [6, 16], strides = [1, 1]} : vector<12x16xf32> to vector<6x16xf32>
    %18 = vector.extract_strided_slice %16 {offsets = [6, 0], sizes = [6, 16], strides = [1, 1]} : vector<12x16xf32> to vector<6x16xf32>
    %19 = vector.shape_cast %17 : vector<6x16xf32> to vector<1x6x16xf32>
    %20 = vector.shape_cast %18 : vector<6x16xf32> to vector<1x6x16xf32>
    %21 = tpu.concatenate %19, %20 in 0 : vector<1x6x16xf32>, vector<1x6x16xf32> -> vector<2x6x16xf32>
    %cst_10 = arith.constant 0.000000e+00 : f32
    %22 = vector.broadcast %cst_10 : f32 to vector<2x6x16xf32>
    %23 = arith.maximumf %21, %22 : vector<2x6x16xf32>
    %cst_11 = arith.constant 0.000000e+00 : f32
    %24 = vector.broadcast %cst_11 : f32 to vector<2x1x16xf32>
    %25 = tpu.concatenate %24, %23, %24 in 1 : vector<2x1x16xf32>, vector<2x6x16xf32>, vector<2x1x16xf32> -> vector<2x8x16xf32>
    %26 = vector.extract_strided_slice %25 {offsets = [0, 0, 0], sizes = [2, 6, 16], strides = [1, 1, 1]} : vector<2x8x16xf32> to vector<2x6x16xf32>
    %27 = vector.extract_strided_slice %25 {offsets = [0, 1, 0], sizes = [2, 6, 16], strides = [1, 1, 1]} : vector<2x8x16xf32> to vector<2x6x16xf32>
    %28 = vector.extract_strided_slice %25 {offsets = [0, 2, 0], sizes = [2, 6, 16], strides = [1, 1, 1]} : vector<2x8x16xf32> to vector<2x6x16xf32>
    %29 = tpu.concatenate %26, %27, %28 in 2 : vector<2x6x16xf32>, vector<2x6x16xf32>, vector<2x6x16xf32> -> vector<2x6x48xf32>
    %30 = vector.extract_strided_slice %29 {offsets = [0, 0, 0], sizes = [1, 6, 48], strides = [1, 1, 1]} : vector<2x6x48xf32> to vector<1x6x48xf32>
    %31 = vector.shape_cast %30 : vector<1x6x48xf32> to vector<6x48xf32>
    %32 = vector.extract_strided_slice %29 {offsets = [1, 0, 0], sizes = [1, 6, 48], strides = [1, 1, 1]} : vector<2x6x48xf32> to vector<1x6x48xf32>
    %33 = vector.shape_cast %32 : vector<1x6x48xf32> to vector<6x48xf32>
    %34 = tpu.concatenate %31, %33 in 0 : vector<6x48xf32>, vector<6x48xf32> -> vector<12x48xf32>
    %cst_12 = arith.constant dense<0.000000e+00> : vector<12x16xf32>
    %35 = tpu.matmul %34, %3, %cst_12 {dimension_numbers = #tpu.dot_dimension_numbers<[1], [0], [0], [1], [0, 0, 1, 1], [], []>} : vector<12x48xf32>, vector<48x16xf32>, vector<12x16xf32> -> vector<12x16xf32>
    %36 = vector.broadcast %4 : vector<1x16xf32> to vector<12x16xf32>
    %37 = arith.addf %35, %36 : vector<12x16xf32>
    %38 = vector.extract_strided_slice %37 {offsets = [0, 0], sizes = [6, 16], strides = [1, 1]} : vector<12x16xf32> to vector<6x16xf32>
    %39 = vector.extract_strided_slice %37 {offsets = [6, 0], sizes = [6, 16], strides = [1, 1]} : vector<12x16xf32> to vector<6x16xf32>
    %40 = vector.shape_cast %38 : vector<6x16xf32> to vector<1x6x16xf32>
    %41 = vector.shape_cast %39 : vector<6x16xf32> to vector<1x6x16xf32>
    %42 = tpu.concatenate %40, %41 in 0 : vector<1x6x16xf32>, vector<1x6x16xf32> -> vector<2x6x16xf32>
    %cst_13 = arith.constant 0.000000e+00 : f32
    %43 = vector.broadcast %cst_13 : f32 to vector<2x6x16xf32>
    %44 = arith.maximumf %42, %43 : vector<2x6x16xf32>
    %cst_14 = arith.constant 0.000000e+00 : f32
    %45 = vector.broadcast %cst_14 : f32 to vector<2x1x16xf32>
    %46 = tpu.concatenate %45, %44, %45 in 1 : vector<2x1x16xf32>, vector<2x6x16xf32>, vector<2x1x16xf32> -> vector<2x8x16xf32>
    %47 = vector.extract_strided_slice %46 {offsets = [0, 0, 0], sizes = [2, 6, 16], strides = [1, 1, 1]} : vector<2x8x16xf32> to vector<2x6x16xf32>
    %48 = vector.extract_strided_slice %46 {offsets = [0, 1, 0], sizes = [2, 6, 16], strides = [1, 1, 1]} : vector<2x8x16xf32> to vector<2x6x16xf32>
    %49 = vector.extract_strided_slice %46 {offsets = [0, 2, 0], sizes = [2, 6, 16], strides = [1, 1, 1]} : vector<2x8x16xf32> to vector<2x6x16xf32>
    %50 = tpu.concatenate %47, %48, %49 in 2 : vector<2x6x16xf32>, vector<2x6x16xf32>, vector<2x6x16xf32> -> vector<2x6x48xf32>
    %51 = vector.extract_strided_slice %50 {offsets = [0, 0, 0], sizes = [1, 6, 48], strides = [1, 1, 1]} : vector<2x6x48xf32> to vector<1x6x48xf32>
    %52 = vector.shape_cast %51 : vector<1x6x48xf32> to vector<6x48xf32>
    %53 = vector.extract_strided_slice %50 {offsets = [1, 0, 0], sizes = [1, 6, 48], strides = [1, 1, 1]} : vector<2x6x48xf32> to vector<1x6x48xf32>
    %54 = vector.shape_cast %53 : vector<1x6x48xf32> to vector<6x48xf32>
    %55 = tpu.concatenate %52, %54 in 0 : vector<6x48xf32>, vector<6x48xf32> -> vector<12x48xf32>
    %cst_15 = arith.constant dense<0.000000e+00> : vector<12x16xf32>
    %56 = tpu.matmul %55, %3, %cst_15 {dimension_numbers = #tpu.dot_dimension_numbers<[1], [0], [0], [1], [0, 0, 1, 1], [], []>} : vector<12x48xf32>, vector<48x16xf32>, vector<12x16xf32> -> vector<12x16xf32>
    %57 = vector.broadcast %4 : vector<1x16xf32> to vector<12x16xf32>
    %58 = arith.addf %56, %57 : vector<12x16xf32>
    %59 = vector.extract_strided_slice %58 {offsets = [0, 0], sizes = [6, 16], strides = [1, 1]} : vector<12x16xf32> to vector<6x16xf32>
    %60 = vector.extract_strided_slice %58 {offsets = [6, 0], sizes = [6, 16], strides = [1, 1]} : vector<12x16xf32> to vector<6x16xf32>
    %61 = vector.shape_cast %59 : vector<6x16xf32> to vector<1x6x16xf32>
    %62 = vector.shape_cast %60 : vector<6x16xf32> to vector<1x6x16xf32>
    %63 = tpu.concatenate %61, %62 in 0 : vector<1x6x16xf32>, vector<1x6x16xf32> -> vector<2x6x16xf32>
    %cst_16 = arith.constant 0.000000e+00 : f32
    %64 = vector.broadcast %cst_16 : f32 to vector<2x1x16xf32>
    %65 = tpu.concatenate %63, %64 in 1 : vector<2x6x16xf32>, vector<2x1x16xf32> -> vector<2x7x16xf32>
    %66 = vector.extract_strided_slice %65 {offsets = [0, 0, 0], sizes = [2, 5, 16], strides = [1, 1, 1]} : vector<2x7x16xf32> to vector<2x5x16xf32>
    %67 = vector.extract_strided_slice %65 {offsets = [0, 1, 0], sizes = [2, 5, 16], strides = [1, 1, 1]} : vector<2x7x16xf32> to vector<2x5x16xf32>
    %68 = arith.maximumf %66, %67 : vector<2x5x16xf32>
    %69 = vector.extract_strided_slice %65 {offsets = [0, 2, 0], sizes = [2, 5, 16], strides = [1, 1, 1]} : vector<2x7x16xf32> to vector<2x5x16xf32>
    %70 = arith.maximumf %68, %69 : vector<2x5x16xf32>
    %71 = vector.extract_strided_slice %70 {offsets = [0, 0, 0], sizes = [2, 1, 16], strides = [1, 1, 1]} : vector<2x5x16xf32> to vector<2x1x16xf32>
    %72 = vector.extract_strided_slice %70 {offsets = [0, 2, 0], sizes = [2, 1, 16], strides = [1, 1, 1]} : vector<2x5x16xf32> to vector<2x1x16xf32>
    %73 = vector.extract_strided_slice %70 {offsets = [0, 4, 0], sizes = [2, 1, 16], strides = [1, 1, 1]} : vector<2x5x16xf32> to vector<2x1x16xf32>
    %74 = tpu.concatenate %71, %72, %73 in 1 : vector<2x1x16xf32>, vector<2x1x16xf32>, vector<2x1x16xf32> -> vector<2x3x16xf32>
    %cst_17 = arith.constant 0.000000e+00 : f32
    %75 = vector.broadcast %cst_17 : f32 to vector<2x3x16xf32>
    %76 = arith.maximumf %74, %75 : vector<2x3x16xf32>
    %cst_18 = arith.constant 0.000000e+00 : f32
    %77 = vector.broadcast %cst_18 : f32 to vector<2x1x16xf32>
    %78 = tpu.concatenate %77, %76, %77 in 1 : vector<2x1x16xf32>, vector<2x3x16xf32>, vector<2x1x16xf32> -> vector<2x5x16xf32>
    %79 = vector.extract_strided_slice %78 {offsets = [0, 0, 0], sizes = [2, 3, 16], strides = [1, 1, 1]} : vector<2x5x16xf32> to vector<2x3x16xf32>
    %80 = vector.extract_strided_slice %78 {offsets = [0, 1, 0], sizes = [2, 3, 16], strides = [1, 1, 1]} : vector<2x5x16xf32> to vector<2x3x16xf32>
    %81 = vector.extract_strided_slice %78 {offsets = [0, 2, 0], sizes = [2, 3, 16], strides = [1, 1, 1]} : vector<2x5x16xf32> to vector<2x3x16xf32>
    %82 = tpu.concatenate %79, %80, %81 in 2 : vector<2x3x16xf32>, vector<2x3x16xf32>, vector<2x3x16xf32> -> vector<2x3x48xf32>
    %83 = vector.extract_strided_slice %82 {offsets = [0, 0, 0], sizes = [1, 3, 48], strides = [1, 1, 1]} : vector<2x3x48xf32> to vector<1x3x48xf32>
    %84 = vector.shape_cast %83 : vector<1x3x48xf32> to vector<3x48xf32>
    %85 = vector.extract_strided_slice %82 {offsets = [1, 0, 0], sizes = [1, 3, 48], strides = [1, 1, 1]} : vector<2x3x48xf32> to vector<1x3x48xf32>
    %86 = vector.shape_cast %85 : vector<1x3x48xf32> to vector<3x48xf32>
    %87 = tpu.concatenate %84, %86 in 0 : vector<3x48xf32>, vector<3x48xf32> -> vector<6x48xf32>
    %cst_19 = arith.constant dense<0.000000e+00> : vector<6x16xf32>
    %88 = tpu.matmul %87, %3, %cst_19 {dimension_numbers = #tpu.dot_dimension_numbers<[1], [0], [0], [1], [0, 0, 1, 1], [], []>} : vector<6x48xf32>, vector<48x16xf32>, vector<6x16xf32> -> vector<6x16xf32>
    %89 = vector.broadcast %4 : vector<1x16xf32> to vector<6x16xf32>
    %90 = arith.addf %88, %89 : vector<6x16xf32>
    %91 = vector.extract_strided_slice %90 {offsets = [0, 0], sizes = [3, 16], strides = [1, 1]} : vector<6x16xf32> to vector<3x16xf32>
    %92 = vector.extract_strided_slice %90 {offsets = [3, 0], sizes = [3, 16], strides = [1, 1]} : vector<6x16xf32> to vector<3x16xf32>
    %93 = vector.shape_cast %91 : vector<3x16xf32> to vector<1x3x16xf32>
    %94 = vector.shape_cast %92 : vector<3x16xf32> to vector<1x3x16xf32>
    %95 = tpu.concatenate %93, %94 in 0 : vector<1x3x16xf32>, vector<1x3x16xf32> -> vector<2x3x16xf32>
    %cst_20 = arith.constant 0.000000e+00 : f32
    %96 = vector.broadcast %cst_20 : f32 to vector<2x3x16xf32>
    %97 = arith.maximumf %95, %96 : vector<2x3x16xf32>
    %cst_21 = arith.constant 0.000000e+00 : f32
    %98 = vector.broadcast %cst_21 : f32 to vector<2x1x16xf32>
    %99 = tpu.concatenate %98, %97, %98 in 1 : vector<2x1x16xf32>, vector<2x3x16xf32>, vector<2x1x16xf32> -> vector<2x5x16xf32>
    %100 = vector.extract_strided_slice %99 {offsets = [0, 0, 0], sizes = [2, 3, 16], strides = [1, 1, 1]} : vector<2x5x16xf32> to vector<2x3x16xf32>
    %101 = vector.extract_strided_slice %99 {offsets = [0, 1, 0], sizes = [2, 3, 16], strides = [1, 1, 1]} : vector<2x5x16xf32> to vector<2x3x16xf32>
    %102 = vector.extract_strided_slice %99 {offsets = [0, 2, 0], sizes = [2, 3, 16], strides = [1, 1, 1]} : vector<2x5x16xf32> to vector<2x3x16xf32>
    %103 = tpu.concatenate %100, %101, %102 in 2 : vector<2x3x16xf32>, vector<2x3x16xf32>, vector<2x3x16xf32> -> vector<2x3x48xf32>
    %104 = vector.extract_strided_slice %103 {offsets = [0, 0, 0], sizes = [1, 3, 48], strides = [1, 1, 1]} : vector<2x3x48xf32> to vector<1x3x48xf32>
    %105 = vector.shape_cast %104 : vector<1x3x48xf32> to vector<3x48xf32>
    %106 = vector.extract_strided_slice %103 {offsets = [1, 0, 0], sizes = [1, 3, 48], strides = [1, 1, 1]} : vector<2x3x48xf32> to vector<1x3x48xf32>
    %107 = vector.shape_cast %106 : vector<1x3x48xf32> to vector<3x48xf32>
    %108 = tpu.concatenate %105, %107 in 0 : vector<3x48xf32>, vector<3x48xf32> -> vector<6x48xf32>
    %cst_22 = arith.constant dense<0.000000e+00> : vector<6x16xf32>
    %109 = tpu.matmul %108, %3, %cst_22 {dimension_numbers = #tpu.dot_dimension_numbers<[1], [0], [0], [1], [0, 0, 1, 1], [], []>} : vector<6x48xf32>, vector<48x16xf32>, vector<6x16xf32> -> vector<6x16xf32>
    %110 = vector.broadcast %4 : vector<1x16xf32> to vector<6x16xf32>
    %111 = arith.addf %109, %110 : vector<6x16xf32>
    %112 = vector.extract_strided_slice %111 {offsets = [0, 0], sizes = [3, 16], strides = [1, 1]} : vector<6x16xf32> to vector<3x16xf32>
    %113 = vector.extract_strided_slice %111 {offsets = [3, 0], sizes = [3, 16], strides = [1, 1]} : vector<6x16xf32> to vector<3x16xf32>
    %114 = vector.shape_cast %112 : vector<3x16xf32> to vector<1x3x16xf32>
    %115 = vector.shape_cast %113 : vector<3x16xf32> to vector<1x3x16xf32>
    %116 = tpu.concatenate %114, %115 in 0 : vector<1x3x16xf32>, vector<1x3x16xf32> -> vector<2x3x16xf32>
    %117 = arith.addf %116, %74 : vector<2x3x16xf32>
    %cst_23 = arith.constant 0.000000e+00 : f32
    %118 = vector.broadcast %cst_23 : f32 to vector<2x1x16xf32>
    %119 = tpu.concatenate %117, %118 in 1 : vector<2x3x16xf32>, vector<2x1x16xf32> -> vector<2x4x16xf32>
    %120 = vector.extract_strided_slice %119 {offsets = [0, 0, 0], sizes = [2, 2, 16], strides = [1, 1, 1]} : vector<2x4x16xf32> to vector<2x2x16xf32>
    %121 = vector.extract_strided_slice %119 {offsets = [0, 1, 0], sizes = [2, 2, 16], strides = [1, 1, 1]} : vector<2x4x16xf32> to vector<2x2x16xf32>
    %122 = arith.maximumf %120, %121 : vector<2x2x16xf32>
    %123 = vector.extract_strided_slice %119 {offsets = [0, 2, 0], sizes = [2, 2, 16], strides = [1, 1, 1]} : vector<2x4x16xf32> to vector<2x2x16xf32>
    %124 = arith.maximumf %122, %123 : vector<2x2x16xf32>
    %125 = vector.extract_strided_slice %124 {offsets = [0, 0, 0], sizes = [2, 1, 16], strides = [1, 1, 1]} : vector<2x2x16xf32> to vector<2x1x16xf32>
    %cst_24 = arith.constant 0.000000e+00 : f32
    %126 = vector.broadcast %cst_24 : f32 to vector<2x1x16xf32>
    %127 = arith.maximumf %125, %126 : vector<2x1x16xf32>
    %cst_25 = arith.constant 0.000000e+00 : f32
    %128 = vector.broadcast %cst_25 : f32 to vector<2x1x16xf32>
    %129 = tpu.concatenate %128, %127, %128 in 1 : vector<2x1x16xf32>, vector<2x1x16xf32>, vector<2x1x16xf32> -> vector<2x3x16xf32>
    %130 = vector.extract_strided_slice %129 {offsets = [0, 0, 0], sizes = [2, 1, 16], strides = [1, 1, 1]} : vector<2x3x16xf32> to vector<2x1x16xf32>
    %131 = vector.extract_strided_slice %129 {offsets = [0, 1, 0], sizes = [2, 1, 16], strides = [1, 1, 1]} : vector<2x3x16xf32> to vector<2x1x16xf32>
    %132 = vector.extract_strided_slice %129 {offsets = [0, 2, 0], sizes = [2, 1, 16], strides = [1, 1, 1]} : vector<2x3x16xf32> to vector<2x1x16xf32>
    %133 = tpu.concatenate %130, %131, %132 in 2 : vector<2x1x16xf32>, vector<2x1x16xf32>, vector<2x1x16xf32> -> vector<2x1x48xf32>
    %134 = vector.extract_strided_slice %133 {offsets = [0, 0, 0], sizes = [1, 1, 48], strides = [1, 1, 1]} : vector<2x1x48xf32> to vector<1x1x48xf32>
    %135 = vector.shape_cast %134 : vector<1x1x48xf32> to vector<1x48xf32>
    %136 = vector.extract_strided_slice %133 {offsets = [1, 0, 0], sizes = [1, 1, 48], strides = [1, 1, 1]} : vector<2x1x48xf32> to vector<1x1x48xf32>
    %137 = vector.shape_cast %136 : vector<1x1x48xf32> to vector<1x48xf32>
    %138 = tpu.concatenate %135, %137 in 0 : vector<1x48xf32>, vector<1x48xf32> -> vector<2x48xf32>
    %cst_26 = arith.constant dense<0.000000e+00> : vector<2x16xf32>
    %139 = tpu.matmul %138, %3, %cst_26 {dimension_numbers = #tpu.dot_dimension_numbers<[1], [0], [0], [1], [0, 0, 1, 1], [], []>} : vector<2x48xf32>, vector<48x16xf32>, vector<2x16xf32> -> vector<2x16xf32>
    %140 = vector.broadcast %4 : vector<1x16xf32> to vector<2x16xf32>
    %141 = arith.addf %139, %140 : vector<2x16xf32>
    %142 = vector.extract_strided_slice %141 {offsets = [0, 0], sizes = [1, 16], strides = [1, 1]} : vector<2x16xf32> to vector<1x16xf32>
    %143 = vector.extract_strided_slice %141 {offsets = [1, 0], sizes = [1, 16], strides = [1, 1]} : vector<2x16xf32> to vector<1x16xf32>
    %144 = vector.shape_cast %142 : vector<1x16xf32> to vector<1x1x16xf32>
    %145 = vector.shape_cast %143 : vector<1x16xf32> to vector<1x1x16xf32>
    %146 = tpu.concatenate %144, %145 in 0 : vector<1x1x16xf32>, vector<1x1x16xf32> -> vector<2x1x16xf32>
    %cst_27 = arith.constant 0.000000e+00 : f32
    %147 = vector.broadcast %cst_27 : f32 to vector<2x1x16xf32>
    %148 = arith.maximumf %146, %147 : vector<2x1x16xf32>
    %cst_28 = arith.constant 0.000000e+00 : f32
    %149 = vector.broadcast %cst_28 : f32 to vector<2x1x16xf32>
    %150 = tpu.concatenate %149, %148, %149 in 1 : vector<2x1x16xf32>, vector<2x1x16xf32>, vector<2x1x16xf32> -> vector<2x3x16xf32>
    %151 = vector.extract_strided_slice %150 {offsets = [0, 0, 0], sizes = [2, 1, 16], strides = [1, 1, 1]} : vector<2x3x16xf32> to vector<2x1x16xf32>
    %152 = vector.extract_strided_slice %150 {offsets = [0, 1, 0], sizes = [2, 1, 16], strides = [1, 1, 1]} : vector<2x3x16xf32> to vector<2x1x16xf32>
    %153 = vector.extract_strided_slice %150 {offsets = [0, 2, 0], sizes = [2, 1, 16], strides = [1, 1, 1]} : vector<2x3x16xf32> to vector<2x1x16xf32>
    %154 = tpu.concatenate %151, %152, %153 in 2 : vector<2x1x16xf32>, vector<2x1x16xf32>, vector<2x1x16xf32> -> vector<2x1x48xf32>
    %155 = vector.extract_strided_slice %154 {offsets = [0, 0, 0], sizes = [1, 1, 48], strides = [1, 1, 1]} : vector<2x1x48xf32> to vector<1x1x48xf32>
    %156 = vector.shape_cast %155 : vector<1x1x48xf32> to vector<1x48xf32>
    %157 = vector.extract_strided_slice %154 {offsets = [1, 0, 0], sizes = [1, 1, 48], strides = [1, 1, 1]} : vector<2x1x48xf32> to vector<1x1x48xf32>
    %158 = vector.shape_cast %157 : vector<1x1x48xf32> to vector<1x48xf32>
    %159 = tpu.concatenate %156, %158 in 0 : vector<1x48xf32>, vector<1x48xf32> -> vector<2x48xf32>
    %cst_29 = arith.constant dense<0.000000e+00> : vector<2x16xf32>
    %160 = tpu.matmul %159, %3, %cst_29 {dimension_numbers = #tpu.dot_dimension_numbers<[1], [0], [0], [1], [0, 0, 1, 1], [], []>} : vector<2x48xf32>, vector<48x16xf32>, vector<2x16xf32> -> vector<2x16xf32>
    %161 = vector.broadcast %4 : vector<1x16xf32> to vector<2x16xf32>
    %162 = arith.addf %160, %161 : vector<2x16xf32>
    %163 = vector.extract_strided_slice %162 {offsets = [0, 0], sizes = [1, 16], strides = [1, 1]} : vector<2x16xf32> to vector<1x16xf32>
    %164 = vector.extract_strided_slice %162 {offsets = [1, 0], sizes = [1, 16], strides = [1, 1]} : vector<2x16xf32> to vector<1x16xf32>
    %165 = vector.shape_cast %163 : vector<1x16xf32> to vector<1x1x16xf32>
    %166 = vector.shape_cast %164 : vector<1x16xf32> to vector<1x1x16xf32>
    %167 = tpu.concatenate %165, %166 in 0 : vector<1x1x16xf32>, vector<1x1x16xf32> -> vector<2x1x16xf32>
    %168 = arith.addf %167, %125 : vector<2x1x16xf32>
    %169 = vector.extract_strided_slice %168 {offsets = [0, 0, 0], sizes = [1, 1, 16], strides = [1, 1, 1]} : vector<2x1x16xf32> to vector<1x1x16xf32>
    %170 = vector.shape_cast %169 : vector<1x1x16xf32> to vector<1x16xf32>
    %171 = vector.extract_strided_slice %168 {offsets = [1, 0, 0], sizes = [1, 1, 16], strides = [1, 1, 1]} : vector<2x1x16xf32> to vector<1x1x16xf32>
    %172 = vector.shape_cast %171 : vector<1x1x16xf32> to vector<1x16xf32>
    %173 = tpu.concatenate %170, %172 in 0 : vector<1x16xf32>, vector<1x16xf32> -> vector<2x16xf32>
    %c0_30 = arith.constant 0 : index
    %c0_31 = arith.constant 0 : index
    %174 = vector.load %arg5[%c0_30, %c0_31] : memref<16x10xf32, #tpu.memory_space<vmem>>, vector<16x10xf32>
    %cst_32 = arith.constant dense<0.000000e+00> : vector<2x10xf32>
    %175 = tpu.matmul %173, %174, %cst_32 {dimension_numbers = #tpu.dot_dimension_numbers<[1], [0], [0], [1], [0, 0, 1, 1], [], []>} : vector<2x16xf32>, vector<16x10xf32>, vector<2x10xf32> -> vector<2x10xf32>
    %c0_33 = arith.constant 0 : index
    %c0_34 = arith.constant 0 : index
    %176 = vector.load %arg6[%c0_33, %c0_34] : memref<1x10xf32, #tpu.memory_space<vmem>>, vector<1x10xf32>
    %177 = vector.broadcast %176 : vector<1x10xf32> to vector<2x10xf32>
    %178 = arith.addf %175, %177 : vector<2x10xf32>
    %c0_35 = arith.constant 0 : index
    %c0_36 = arith.constant 0 : index
    %179 = vector.load %arg7[%c0_35, %c0_36] : memref<2x10xf32, #tpu.memory_space<vmem>>, vector<2x10xf32>
    tpu.vector_store %arg7[%c0_35, %c0_36], %178 {strides = array<i32>} : memref<2x10xf32, #tpu.memory_space<vmem>>, vector<2x10xf32>,
    return
  }
}

</mosaic_0001>

<llo_original>
// kernel: tpu_custom_call.1
$region0: #{tpu_custom_call.1}
  #allocation0 [shape = 'u32[]', space=smem, size = 0x4, offset = 0x4, fixed_abs, tag = 'smem constant byte address 0x4 - core index']
  #allocation1 [shape = 'u32[144,128]{1,0:T(1,128)}', space=vmem, size = 0x12000, scoped, tag = 'internal scratch']
  %s0 = inlined_call_operand.vmem [shape: f32[2,8,32], index: 0, kind: input, shape index: {}]
  %s1 = inlined_call_operand.vmem [shape: f32[96,16], index: 1, kind: input, shape index: {}]
  %s2 = inlined_call_operand.vmem [shape: f32[1,16], index: 2, kind: input, shape index: {}]
  %s3 = inlined_call_operand.vmem [shape: f32[48,16], index: 3, kind: input, shape index: {}]
  %s4 = inlined_call_operand.vmem [shape: f32[1,16], index: 4, kind: input, shape index: {}]
  %s5 = inlined_call_operand.vmem [shape: f32[16,10], index: 5, kind: input, shape index: {}]
  %s6 = inlined_call_operand.vmem [shape: f32[1,10], index: 6, kind: input, shape index: {}]
  %s7 = inlined_call_operand.hbm [shape: f32[2,10], index: 7, kind: output, shape index: {}]
  %s8 = sld [smem:[#allocation0]]
  $region38: #{tpu_custom_call.1} parent=0
    _
  %s10 = ssub.s32 1, %s8
  %s11 = scalar_select 0, %s10, %s8
  $region1: #{tpu_custom_call.1} parent=0
    #allocation2 [shape = 'u8[1024]{0}', space=vmem, size = 0x400, scoped, tag = 'output window, operand 0, single buffered']
    #allocation3 [shape = 's32[1]{0}', space=sflag, size = 0x4, scoped, tag = 'scoped memory for tpu_custom_call.1']
    %12 = vsyncpa [#allocation3], 0
    // Predicated region
    $region2: #{tpu_custom_call.1} parent=1 // pred_check
      _
    $region3: #{tpu_custom_call.1} parent=1 // pred_check_branch
      %14 = sbr.rel (0) target = $region5
    $region4: #{tpu_custom_call.1} parent=1 // pred_region
      _
    $region5: #{tpu_custom_call.1} parent=1 // pred_fallthru
      _
    // Predicated region
    $region6: #{tpu_custom_call.1} parent=1 // pred_check
      _
    $region7: #{tpu_custom_call.1} parent=1 // pred_check_branch
      %16 = sbr.rel (0) target = $region9
    $region8: #{tpu_custom_call.1} parent=1 // pred_region
      _
    $region9: #{tpu_custom_call.1} parent=1 // pred_fallthru
      _
    // Predicated region
    $region10: #{tpu_custom_call.1} parent=1 // pred_check
      _
    $region11: #{tpu_custom_call.1} parent=1 // pred_check_branch
      %18 = sbr.rel (0) target = $region13
    $region12: #{tpu_custom_call.1} parent=1 // pred_region
      _
    $region13: #{tpu_custom_call.1} parent=1 // pred_fallthru
      _
    // Predicated region
    $region14: #{tpu_custom_call.1} parent=1 // pred_check
      _
    $region15: #{tpu_custom_call.1} parent=1 // pred_check_branch
      %20 = sbr.rel (0) target = $region17
    $region16: #{tpu_custom_call.1} parent=1 // pred_region
      _
    $region17: #{tpu_custom_call.1} parent=1 // pred_fallthru
      _
    // Predicated region
    $region18: #{tpu_custom_call.1} parent=1 // pred_check
      _
    $region19: #{tpu_custom_call.1} parent=1 // pred_check_branch
      %22 = sbr.rel (0) target = $region21
    $region20: #{tpu_custom_call.1} parent=1 // pred_region
      _
    $region21: #{tpu_custom_call.1} parent=1 // pred_fallthru
      _
    // Predicated region
    $region22: #{tpu_custom_call.1} parent=1 // pred_check
      _
    $region23: #{tpu_custom_call.1} parent=1 // pred_check_branch
      %24 = sbr.rel (0) target = $region25
    $region24: #{tpu_custom_call.1} parent=1 // pred_region
      _
    $region25: #{tpu_custom_call.1} parent=1 // pred_fallthru
      _
    // Predicated region
    $region26: #{tpu_custom_call.1} parent=1 // pred_check
      _
    $region27: #{tpu_custom_call.1} parent=1 // pred_check_branch
      %26 = sbr.rel (0) target = $region29
    $region28: #{tpu_custom_call.1} parent=1 // pred_region
      _
    $region29: #{tpu_custom_call.1} parent=1 // pred_fallthru
      _
    %v27 = vld [vmem:[%s0] sm:$0xff]
    %v28 = vld [vmem:[%s0 + $0x8] sm:$0xff]
    %v29 = vld [vmem:[%s1] sm:$0xff]
    %v30 = vld [vmem:[%s1 + $0x8] sm:$0xff]
    %v31 = vld [vmem:[%s1 + $0x10] sm:$0xff]
    %v32 = vld [vmem:[%s1 + $0x18] sm:$0xff]
    %v33 = vld [vmem:[%s1 + $0x20] sm:$0xff]
    %v34 = vld [vmem:[%s1 + $0x28] sm:$0xff]
    %v35 = vld [vmem:[%s1 + $0x30] sm:$0xff]
    %v36 = vld [vmem:[%s1 + $0x38] sm:$0xff]
    %v37 = vld [vmem:[%s1 + $0x40] sm:$0xff]
    %v38 = vld [vmem:[%s1 + $0x48] sm:$0xff]
    %v39 = vld [vmem:[%s1 + $0x50] sm:$0xff]
    %v40 = vld [vmem:[%s1 + $0x58] sm:$0xff]
    %v41 = vld [vmem:[%s2] sm:$0x1]
    %v42 = vld [vmem:[%s3] sm:$0xff]
    %v43 = vld [vmem:[%s3 + $0x8] sm:$0xff]
    %v44 = vld [vmem:[%s3 + $0x10] sm:$0xff]
    %v45 = vld [vmem:[%s3 + $0x18] sm:$0xff]
    %v46 = vld [vmem:[%s3 + $0x20] sm:$0xff]
    %v47 = vld [vmem:[%s3 + $0x28] sm:$0xff]
    %v48 = vld [vmem:[%s4] sm:$0x1]
    %v51 = vrot.slane %v27, 1
    %v52 = vrot.slane %v28, 1
    %53 = vrot.lane.b32.xlu0 %v51, 32
    %v54 = vpop.permute.xlu0 %53
    %55 = vrot.lane.b32.xlu0 %v52, 32
    %v56 = vpop.permute.xlu0 %55
    %v59 = vrot.slane %v27, 2
    %v60 = vrot.slane %v28, 2
    %61 = vrot.lane.b32.xlu0 %v59, 64
    %v62 = vpop.permute.xlu0 %61
    %63 = vrot.lane.b32.xlu0 %v60, 64
    %v64 = vpop.permute.xlu0 %63
    %vm67 = vcmask 261120
    %v68 = vsel %vm67, %v27, %v54
    %v69 = vsel %vm67, %v28, %v56
    %vm70 = vcmask 523264
    %v71 = vsel %vm70, %v68, %v62
    %v72 = vsel %vm70, %v69, %v64
    %v74 = vrot.slane %v72, 2
    %vm76 = vcmask 1045504
    %v77 = vsel %vm76, %v71, %v74
    %v79 = vlaneseq
    %v80 = vshrl.u32 %v79, 7
    %v81 = vsub.s32 0, %v80
    %v82 = vrot.slane %v41, %v81
    %vm84 = vcmask 785408
    %v86 = vsel %vm84, %v77, 0
    %v88 = vsel %vm84, %v74, 0
    %90 = vmatprep.subr.mxu0 0.0
    %91 = vmatpush1.msra.mxu0 0.0
    %92 = vmatprep.subr.mxu0 0.0
    %93 = vmatpush1.msra.mxu0 0.0
    %94 = vmatprep.subr.mxu0 0.0
    %95 = vmatpush1.msra.mxu0 0.0
    %96 = vmatprep.subr.mxu0 0.0
    %97 = vmatpush1.msra.mxu0 0.0
    %98 = vmatprep.subr.mxu0 0.0
    %99 = vmatpush1.msra.mxu0 %v40
    %100 = vmatprep.subr.mxu0 0.0
    %101 = vmatpush1.msra.mxu0 %v39
    %102 = vmatprep.subr.mxu0 0.0
    %103 = vmatpush1.msra.mxu0 %v38
    %104 = vmatprep.subr.mxu0 0.0
    %105 = vmatpush1.msra.mxu0 %v37
    %106 = vmatprep.subr.mxu0 0.0
    %107 = vmatpush1.msra.mxu0 %v36
    %108 = vmatprep.subr.mxu0 0.0
    %109 = vmatpush1.msra.mxu0 %v35
    %110 = vmatprep.subr.mxu0 0.0
    %111 = vmatpush1.msra.mxu0 %v34
    %112 = vmatprep.subr.mxu0 0.0
    %113 = vmatpush1.msra.mxu0 %v33
    %114 = vmatprep.subr.mxu0 0.0
    %115 = vmatpush1.msra.mxu0 %v32
    %116 = vmatprep.subr.mxu0 0.0
    %117 = vmatpush1.msra.mxu0 %v31
    %118 = vmatprep.subr.mxu0 0.0
    %119 = vmatpush1.msra.mxu0 %v30
    %120 = vmatprep.subr.mxu0 0.0
    %121 = vmatpush1.msra.mxu0 %v29
    %122 = vmatprep.subr.mxu0 0.0
    %123 = vmatpush2.msra.mxu0 0.0
    %124 = vmatprep.subr.mxu0 0.0
    %125 = vmatpush2.msra.mxu0 0.0
    %126 = vmatprep.subr.mxu0 0.0
    %127 = vmatpush2.msra.mxu0 0.0
    %128 = vmatprep.subr.mxu0 0.0
    %129 = vmatpush2.msra.mxu0 0.0
    %130 = vmatprep.subr.mxu0 0.0
    %131 = vmatpush2.msra.mxu0 0.0
    %132 = vmatprep.subr.mxu0 0.0
    %133 = vmatpush2.msra.mxu0 0.0
    %134 = vmatprep.subr.mxu0 0.0
    %135 = vmatpush2.msra.mxu0 0.0
    %136 = vmatprep.subr.mxu0 0.0
    %137 = vmatpush2.msra.mxu0 0.0
    %138 = vmatprep.subr.mxu0 0.0
    %139 = vmatpush2.msra.mxu0 0.0
    %140 = vmatprep.subr.mxu0 0.0
    %141 = vmatpush2.msra.mxu0 0.0
    %142 = vmatprep.subr.mxu0 0.0
    %143 = vmatpush2.msra.mxu0 0.0
    %144 = vmatprep.subr.mxu0 0.0
    %145 = vmatpush2.msra.mxu0 0.0
    %146 = vmatprep.subr.mxu0 0.0
    %147 = vmatpush2.msra.mxu0 0.0
    %148 = vmatprep.subr.mxu0 0.0
    %149 = vmatpush2.msra.mxu0 0.0
    %150 = vmatprep.subr.mxu0 0.0
    %151 = vmatpush2.msra.mxu0 0.0
    %152 = vmatprep.subr.mxu0 0.0
    %153 = vmatpush2.msra.mxu0 0.0
    %154 = vmatprep.mubr.f32.mxu0 0.0
    %155 = vmatmul.mubr.f32.gmra.mxu0 %v86
    %v156 = vpop.f32.mrf.mxu0
    %v157 = vadd.f32 %v82, %v156
    %v158 = vpop.f32.mrf.mxu0
    %159 = vmatprep.mubr.f32.mxu0 0.0
    %160 = vmatmul.mubr.f32.gmra.mxu0 %v88
    %v161 = vpop.f32.mrf.mxu0
    %v162 = vadd.f32 %v82, %v161
    %v163 = vpop.f32.mrf.mxu0
    %164 = vdwg.mxu0
    %vm167 = vcmask 1041408
    %v168 = vrot.slane %v157, 6
    %v169 = vrot.slane %v162, 6
    %v170 = vsel %vm167, %v168, %v169
    %v172 = vmax.f32 %v157, 0.0
    %v173 = vmax.f32 %v170, 0.0
    %v176 = vrot.slane %v172, 7
    %v177 = vrot.slane %v173, 7
    %vm180 = vcmask 1040384
    %v181 = vsel %vm180, 0.0, %v176
    %v182 = vsel %vm180, 0.0, %v177
    %vm183 = vcmask 1046528
    %v184 = vsel %vm183, %v181, 0.0
    %v185 = vsel %vm183, %v182, 0.0
    %v188 = vrot.slane %v184, 1
    %v189 = vrot.slane %v185, 1
    %190 = vrot.lane.b32.xlu0 %v188, 16
    %v191 = vpop.permute.xlu0 %190
    %192 = vrot.lane.b32.xlu0 %v189, 16
    %v193 = vpop.permute.xlu0 %192
    %v196 = vrot.slane %v184, 2
    %v197 = vrot.slane %v185, 2
    %198 = vrot.lane.b32.xlu0 %v196, 32
    %v199 = vpop.permute.xlu0 %198
    %200 = vrot.lane.b32.xlu0 %v197, 32
    %v201 = vpop.permute.xlu0 %200
    %vm204 = vcmask 130048
    %v205 = vsel %vm204, %v184, %v191
    %v206 = vsel %vm204, %v185, %v193
    %v207 = vsel %vm67, %v205, %v199
    %v208 = vsel %vm67, %v206, %v201
    %v210 = vrot.slane %v208, 2
    %v212 = vsel %vm76, %v207, %v210
    %v214 = vlaneseq
    %v215 = vshrl.u32 %v214, 7
    %v216 = vsub.s32 0, %v215
    %v217 = vrot.slane %v48, %v216
    %vm219 = vcmask 392192
    %v221 = vsel %vm219, %v212, 0
    %v223 = vsel %vm219, %v210, 0
    %225 = vmatprep.subr.mxu0 0.0
    %226 = vmatpush1.msra.mxu0 0.0
    %227 = vmatprep.subr.mxu0 0.0
    %228 = vmatpush1.msra.mxu0 0.0
    %229 = vmatprep.subr.mxu0 0.0
    %230 = vmatpush1.msra.mxu0 0.0
    %231 = vmatprep.subr.mxu0 0.0
    %232 = vmatpush1.msra.mxu0 0.0
    %233 = vmatprep.subr.mxu0 0.0
    %234 = vmatpush1.msra.mxu0 0.0
    %235 = vmatprep.subr.mxu0 0.0
    %236 = vmatpush1.msra.mxu0 0.0
    %237 = vmatprep.subr.mxu0 0.0
    %238 = vmatpush1.msra.mxu0 0.0
    %239 = vmatprep.subr.mxu0 0.0
    %240 = vmatpush1.msra.mxu0 0.0
    %241 = vmatprep.subr.mxu0 0.0
    %242 = vmatpush1.msra.mxu0 0.0
    %243 = vmatprep.subr.mxu0 0.0
    %244 = vmatpush1.msra.mxu0 0.0
    %245 = vmatprep.subr.mxu0 0.0
    %246 = vmatpush1.msra.mxu0 %v47
    %247 = vmatprep.subr.mxu0 0.0
    %248 = vmatpush1.msra.mxu0 %v46
    %249 = vmatprep.subr.mxu0 0.0
    %250 = vmatpush1.msra.mxu0 %v45
    %251 = vmatprep.subr.mxu0 0.0
    %252 = vmatpush1.msra.mxu0 %v44
    %253 = vmatprep.subr.mxu0 0.0
    %254 = vmatpush1.msra.mxu0 %v43
    %255 = vmatprep.subr.mxu0 0.0
    %256 = vmatpush1.msra.mxu0 %v42
    %257 = vmatprep.subr.mxu0 0.0
    %258 = vmatpush2.msra.mxu0 0.0
    %259 = vmatprep.subr.mxu0 0.0
    %260 = vmatpush2.msra.mxu0 0.0
    %261 = vmatprep.subr.mxu0 0.0
    %262 = vmatpush2.msra.mxu0 0.0
    %263 = vmatprep.subr.mxu0 0.0
    %264 = vmatpush2.msra.mxu0 0.0
    %265 = vmatprep.subr.mxu0 0.0
    %266 = vmatpush2.msra.mxu0 0.0
    %267 = vmatprep.subr.mxu0 0.0
    %268 = vmatpush2.msra.mxu0 0.0
    %269 = vmatprep.subr.mxu0 0.0
    %270 = vmatpush2.msra.mxu0 0.0
    %271 = vmatprep.subr.mxu0 0.0
    %272 = vmatpush2.msra.mxu0 0.0
    %273 = vmatprep.subr.mxu0 0.0
    %274 = vmatpush2.msra.mxu0 0.0
    %275 = vmatprep.subr.mxu0 0.0
    %276 = vmatpush2.msra.mxu0 0.0
    %277 = vmatprep.subr.mxu0 0.0
    %278 = vmatpush2.msra.mxu0 0.0
    %279 = vmatprep.subr.mxu0 0.0
    %280 = vmatpush2.msra.mxu0 0.0
    %281 = vmatprep.subr.mxu0 0.0
    %282 = vmatpush2.msra.mxu0 0.0
    %283 = vmatprep.subr.mxu0 0.0
    %284 = vmatpush2.msra.mxu0 0.0
    %285 = vmatprep.subr.mxu0 0.0
    %286 = vmatpush2.msra.mxu0 0.0
    %287 = vmatprep.subr.mxu0 0.0
    %288 = vmatpush2.msra.mxu0 0.0
    %289 = vmatprep.mubr.f32.mxu0 0.0
    %290 = vmatmul.mubr.f32.gmra.mxu0 %v221
    %v291 = vpop.f32.mrf.mxu0
    %v292 = vadd.f32 %v217, %v291
    %v293 = vpop.f32.mrf.mxu0
    %294 = vmatprep.mubr.f32.mxu0 0.0
    %295 = vmatmul.mubr.f32.gmra.mxu0 %v223
    %v296 = vpop.f32.mrf.mxu0
    %v297 = vadd.f32 %v217, %v296
    %v298 = vpop.f32.mrf.mxu0
    %299 = vdwg.mxu0
    %v302 = vrot.slane %v292, 6
    %v303 = vrot.slane %v297, 6
    %v304 = vsel %vm167, %v302, %v303
    %v306 = vmax.f32 %v292, 0.0
    %v307 = vmax.f32 %v304, 0.0
    %v310 = vrot.slane %v306, 7
    %v311 = vrot.slane %v307, 7
    %v314 = vsel %vm180, 0.0, %v310
    %v315 = vsel %vm180, 0.0, %v311
    %v316 = vsel %vm183, %v314, 0.0
    %v317 = vsel %vm183, %v315, 0.0
    %v320 = vrot.slane %v316, 1
    %v321 = vrot.slane %v317, 1
    %322 = vrot.lane.b32.xlu0 %v320, 16
    %v323 = vpop.permute.xlu0 %322
    %324 = vrot.lane.b32.xlu0 %v321, 16
    %v325 = vpop.permute.xlu0 %324
    %v328 = vrot.slane %v316, 2
    %v329 = vrot.slane %v317, 2
    %330 = vrot.lane.b32.xlu0 %v328, 32
    %v331 = vpop.permute.xlu0 %330
    %332 = vrot.lane.b32.xlu0 %v329, 32
    %v333 = vpop.permute.xlu0 %332
    %v336 = vsel %vm204, %v316, %v323
    %v337 = vsel %vm204, %v317, %v325
    %v338 = vsel %vm67, %v336, %v331
    %v339 = vsel %vm67, %v337, %v333
    %v341 = vrot.slane %v339, 2
    %v343 = vsel %vm76, %v338, %v341
    %v345 = vsel %vm219, %v343, 0
    %v347 = vsel %vm219, %v341, 0
    %349 = vmatprep.subr.mxu0 0.0
    %350 = vmatpush1.msra.mxu0 0.0
    %351 = vmatprep.subr.mxu0 0.0
    %352 = vmatpush1.msra.mxu0 0.0
    %353 = vmatprep.subr.mxu0 0.0
    %354 = vmatpush1.msra.mxu0 0.0
    %355 = vmatprep.subr.mxu0 0.0
    %356 = vmatpush1.msra.mxu0 0.0
    %357 = vmatprep.subr.mxu0 0.0
    %358 = vmatpush1.msra.mxu0 0.0
    %359 = vmatprep.subr.mxu0 0.0
    %360 = vmatpush1.msra.mxu0 0.0
    %361 = vmatprep.subr.mxu0 0.0
    %362 = vmatpush1.msra.mxu0 0.0
    %363 = vmatprep.subr.mxu0 0.0
    %364 = vmatpush1.msra.mxu0 0.0
    %365 = vmatprep.subr.mxu0 0.0
    %366 = vmatpush1.msra.mxu0 0.0
    %367 = vmatprep.subr.mxu0 0.0
    %368 = vmatpush1.msra.mxu0 0.0
    %369 = vmatprep.subr.mxu0 0.0
    %370 = vmatpush1.msra.mxu0 %v47
    %371 = vmatprep.subr.mxu0 0.0
    %372 = vmatpush1.msra.mxu0 %v46
    %373 = vmatprep.subr.mxu0 0.0
    %374 = vmatpush1.msra.mxu0 %v45
    %375 = vmatprep.subr.mxu0 0.0
    %376 = vmatpush1.msra.mxu0 %v44
    %377 = vmatprep.subr.mxu0 0.0
    %378 = vmatpush1.msra.mxu0 %v43
    %379 = vmatprep.subr.mxu0 0.0
    %380 = vmatpush1.msra.mxu0 %v42
    %381 = vmatprep.subr.mxu0 0.0
    %382 = vmatpush2.msra.mxu0 0.0
    %383 = vmatprep.subr.mxu0 0.0
    %384 = vmatpush2.msra.mxu0 0.0
    %385 = vmatprep.subr.mxu0 0.0
    %386 = vmatpush2.msra.mxu0 0.0
    %387 = vmatprep.subr.mxu0 0.0
    %388 = vmatpush2.msra.mxu0 0.0
    %389 = vmatprep.subr.mxu0 0.0
    %390 = vmatpush2.msra.mxu0 0.0
    %391 = vmatprep.subr.mxu0 0.0
    %392 = vmatpush2.msra.mxu0 0.0
    %393 = vmatprep.subr.mxu0 0.0
    %394 = vmatpush2.msra.mxu0 0.0
    %395 = vmatprep.subr.mxu0 0.0
    %396 = vmatpush2.msra.mxu0 0.0
    %397 = vmatprep.subr.mxu0 0.0
    %398 = vmatpush2.msra.mxu0 0.0
    %399 = vmatprep.subr.mxu0 0.0
    %400 = vmatpush2.msra.mxu0 0.0
    %401 = vmatprep.subr.mxu0 0.0
    %402 = vmatpush2.msra.mxu0 0.0
    %403 = vmatprep.subr.mxu0 0.0
    %404 = vmatpush2.msra.mxu0 0.0
    %405 = vmatprep.subr.mxu0 0.0
    %406 = vmatpush2.msra.mxu0 0.0
    %407 = vmatprep.subr.mxu0 0.0
    %408 = vmatpush2.msra.mxu0 0.0
    %409 = vmatprep.subr.mxu0 0.0
    %410 = vmatpush2.msra.mxu0 0.0
    %411 = vmatprep.subr.mxu0 0.0
    %412 = vmatpush2.msra.mxu0 0.0
    %413 = vmatprep.mubr.f32.mxu0 0.0
    %414 = vmatmul.mubr.f32.gmra.mxu0 %v345
    %v415 = vpop.f32.mrf.mxu0
    %v416 = vadd.f32 %v217, %v415
    %v417 = vpop.f32.mrf.mxu0
    %418 = vmatprep.mubr.f32.mxu0 0.0
    %419 = vmatmul.mubr.f32.gmra.mxu0 %v347
    %v420 = vpop.f32.mrf.mxu0
    %v421 = vadd.f32 %v217, %v420
    %v422 = vpop.f32.mrf.mxu0
    %423 = vdwg.mxu0
    %v426 = vrot.slane %v416, 6
    %v427 = vrot.slane %v421, 6
    %v428 = vsel %vm167, %v426, %v427
    %v430 = vsel %vm76, %v416, 0.0
    %v431 = vsel %vm76, %v428, 0.0
    %v434 = vrot.slane %v430, 1
    %v435 = vrot.slane %v431, 1
    %v438 = vmax.f32 %v430, %v434
    %v439 = vmax.f32 %v431, %v435
    %v440 = vrot.slane %v430, 2
    %v441 = vrot.slane %v431, 2
    %v444 = vmax.f32 %v438, %v440
    %v445 = vmax.f32 %v439, %v441
    %v448 = vrot.slane %v444, 1
    %v449 = vrot.slane %v445, 1
    %v452 = vrot.slane %v444, 2
    %v453 = vrot.slane %v445, 2
    %v456 = vsel %vm180, %v444, %v448
    %v457 = vsel %vm180, %v445, %v449
    %v458 = vsel %vm167, %v456, %v452
    %v459 = vsel %vm167, %v457, %v453
    %v460 = vmax.f32 %v458, 0.0
    %v461 = vmax.f32 %v459, 0.0
    %v464 = vrot.slane %v460, 7
    %v465 = vrot.slane %v461, 7
    %v468 = vsel %vm180, 0.0, %v464
    %v469 = vsel %vm180, 0.0, %v465
    %vm470 = vcmask 1043456
    %v471 = vsel %vm470, %v468, 0.0
    %v472 = vsel %vm470, %v469, 0.0
    %v475 = vrot.slane %v471, 1
    %v476 = vrot.slane %v472, 1
    %477 = vrot.lane.b32.xlu0 %v475, 16
    %v478 = vpop.permute.xlu0 %477
    %479 = vrot.lane.b32.xlu0 %v476, 16
    %v480 = vpop.permute.xlu0 %479
    %v483 = vrot.slane %v471, 2
    %v484 = vrot.slane %v472, 2
    %485 = vrot.lane.b32.xlu0 %v483, 32
    %v486 = vpop.permute.xlu0 %485
    %487 = vrot.lane.b32.xlu0 %v484, 32
    %v488 = vpop.permute.xlu0 %487
    %v491 = vsel %vm204, %v471, %v478
    %v492 = vsel %vm204, %v472, %v480
    %v493 = vsel %vm67, %v491, %v486
    %v494 = vsel %vm67, %v492, %v488
    %v496 = vrot.slane %v494, 5
    %vm498 = vcmask 1042432
    %v499 = vsel %vm498, %v493, %v496
    %v501 = vsel %vm219, %v499, 0
    %503 = vmatprep.subr.mxu0 0.0
    %504 = vmatpush1.msra.mxu0 0.0
    %505 = vmatprep.subr.mxu0 0.0
    %506 = vmatpush1.msra.mxu0 0.0
    %507 = vmatprep.subr.mxu0 0.0
    %508 = vmatpush1.msra.mxu0 0.0
    %509 = vmatprep.subr.mxu0 0.0
    %510 = vmatpush1.msra.mxu0 0.0
    %511 = vmatprep.subr.mxu0 0.0
    %512 = vmatpush1.msra.mxu0 0.0
    %513 = vmatprep.subr.mxu0 0.0
    %514 = vmatpush1.msra.mxu0 0.0
    %515 = vmatprep.subr.mxu0 0.0
    %516 = vmatpush1.msra.mxu0 0.0
    %517 = vmatprep.subr.mxu0 0.0
    %518 = vmatpush1.msra.mxu0 0.0
    %519 = vmatprep.subr.mxu0 0.0
    %520 = vmatpush1.msra.mxu0 0.0
    %521 = vmatprep.subr.mxu0 0.0
    %522 = vmatpush1.msra.mxu0 0.0
    %523 = vmatprep.subr.mxu0 0.0
    %524 = vmatpush1.msra.mxu0 %v47
    %525 = vmatprep.subr.mxu0 0.0
    %526 = vmatpush1.msra.mxu0 %v46
    %527 = vmatprep.subr.mxu0 0.0
    %528 = vmatpush1.msra.mxu0 %v45
    %529 = vmatprep.subr.mxu0 0.0
    %530 = vmatpush1.msra.mxu0 %v44
    %531 = vmatprep.subr.mxu0 0.0
    %532 = vmatpush1.msra.mxu0 %v43
    %533 = vmatprep.subr.mxu0 0.0
    %534 = vmatpush1.msra.mxu0 %v42
    %535 = vmatprep.subr.mxu0 0.0
    %536 = vmatpush2.msra.mxu0 0.0
    %537 = vmatprep.subr.mxu0 0.0
    %538 = vmatpush2.msra.mxu0 0.0
    %539 = vmatprep.subr.mxu0 0.0
    %540 = vmatpush2.msra.mxu0 0.0
    %541 = vmatprep.subr.mxu0 0.0
    %542 = vmatpush2.msra.mxu0 0.0
    %543 = vmatprep.subr.mxu0 0.0
    %544 = vmatpush2.msra.mxu0 0.0
    %545 = vmatprep.subr.mxu0 0.0
    %546 = vmatpush2.msra.mxu0 0.0
    %547 = vmatprep.subr.mxu0 0.0
    %548 = vmatpush2.msra.mxu0 0.0
    %549 = vmatprep.subr.mxu0 0.0
    %550 = vmatpush2.msra.mxu0 0.0
    %551 = vmatprep.subr.mxu0 0.0
    %552 = vmatpush2.msra.mxu0 0.0
    %553 = vmatprep.subr.mxu0 0.0
    %554 = vmatpush2.msra.mxu0 0.0
    %555 = vmatprep.subr.mxu0 0.0
    %556 = vmatpush2.msra.mxu0 0.0
    %557 = vmatprep.subr.mxu0 0.0
    %558 = vmatpush2.msra.mxu0 0.0
    %559 = vmatprep.subr.mxu0 0.0
    %560 = vmatpush2.msra.mxu0 0.0
    %561 = vmatprep.subr.mxu0 0.0
    %562 = vmatpush2.msra.mxu0 0.0
    %563 = vmatprep.subr.mxu0 0.0
    %564 = vmatpush2.msra.mxu0 0.0
    %565 = vmatprep.subr.mxu0 0.0
    %566 = vmatpush2.msra.mxu0 0.0
    %567 = vmatprep.mubr.f32.mxu0 0.0
    %568 = vmatmul.mubr.f32.gmra.mxu0 %v501
    %v569 = vpop.f32.mrf.mxu0
    %v570 = vadd.f32 %v217, %v569
    %v571 = vpop.f32.mrf.mxu0
    %572 = vdwg.mxu0
    %v574 = vrot.slane %v570, 3
    %v576 = vmax.f32 %v570, 0.0
    %v577 = vmax.f32 %v574, 0.0
    %v580 = vrot.slane %v576, 7
    %v581 = vrot.slane %v577, 7
    %v584 = vsel %vm180, 0.0, %v580
    %v585 = vsel %vm180, 0.0, %v581
    %v586 = vsel %vm470, %v584, 0.0
    %v587 = vsel %vm470, %v585, 0.0
    %v590 = vrot.slane %v586, 1
    %v591 = vrot.slane %v587, 1
    %592 = vrot.lane.b32.xlu0 %v590, 16
    %v593 = vpop.permute.xlu0 %592
    %594 = vrot.lane.b32.xlu0 %v591, 16
    %v595 = vpop.permute.xlu0 %594
    %v598 = vrot.slane %v586, 2
    %v599 = vrot.slane %v587, 2
    %600 = vrot.lane.b32.xlu0 %v598, 32
    %v601 = vpop.permute.xlu0 %600
    %602 = vrot.lane.b32.xlu0 %v599, 32
    %v603 = vpop.permute.xlu0 %602
    %v606 = vsel %vm204, %v586, %v593
    %v607 = vsel %vm204, %v587, %v595
    %v608 = vsel %vm67, %v606, %v601
    %v609 = vsel %vm67, %v607, %v603
    %v611 = vrot.slane %v609, 5
    %v613 = vsel %vm498, %v608, %v611
    %v615 = vsel %vm219, %v613, 0
    %617 = vmatprep.subr.mxu0 0.0
    %618 = vmatpush1.msra.mxu0 0.0
    %619 = vmatprep.subr.mxu0 0.0
    %620 = vmatpush1.msra.mxu0 0.0
    %621 = vmatprep.subr.mxu0 0.0
    %622 = vmatpush1.msra.mxu0 0.0
    %623 = vmatprep.subr.mxu0 0.0
    %624 = vmatpush1.msra.mxu0 0.0
    %625 = vmatprep.subr.mxu0 0.0
    %626 = vmatpush1.msra.mxu0 0.0
    %627 = vmatprep.subr.mxu0 0.0
    %628 = vmatpush1.msra.mxu0 0.0
    %629 = vmatprep.subr.mxu0 0.0
    %630 = vmatpush1.msra.mxu0 0.0
    %631 = vmatprep.subr.mxu0 0.0
    %632 = vmatpush1.msra.mxu0 0.0
    %633 = vmatprep.subr.mxu0 0.0
    %634 = vmatpush1.msra.mxu0 0.0
    %635 = vmatprep.subr.mxu0 0.0
    %636 = vmatpush1.msra.mxu0 0.0
    %637 = vmatprep.subr.mxu0 0.0
    %638 = vmatpush1.msra.mxu0 %v47
    %639 = vmatprep.subr.mxu0 0.0
    %640 = vmatpush1.msra.mxu0 %v46
    %641 = vmatprep.subr.mxu0 0.0
    %642 = vmatpush1.msra.mxu0 %v45
    %643 = vmatprep.subr.mxu0 0.0
    %644 = vmatpush1.msra.mxu0 %v44
    %645 = vmatprep.subr.mxu0 0.0
    %646 = vmatpush1.msra.mxu0 %v43
    %647 = vmatprep.subr.mxu0 0.0
    %648 = vmatpush1.msra.mxu0 %v42
    %649 = vmatprep.subr.mxu0 0.0
    %650 = vmatpush2.msra.mxu0 0.0
    %651 = vmatprep.subr.mxu0 0.0
    %652 = vmatpush2.msra.mxu0 0.0
    %653 = vmatprep.subr.mxu0 0.0
    %654 = vmatpush2.msra.mxu0 0.0
    %655 = vmatprep.subr.mxu0 0.0
    %656 = vmatpush2.msra.mxu0 0.0
    %657 = vmatprep.subr.mxu0 0.0
    %658 = vmatpush2.msra.mxu0 0.0
    %659 = vmatprep.subr.mxu0 0.0
    %660 = vmatpush2.msra.mxu0 0.0
    %661 = vmatprep.subr.mxu0 0.0
    %662 = vmatpush2.msra.mxu0 0.0
    %663 = vmatprep.subr.mxu0 0.0
    %664 = vmatpush2.msra.mxu0 0.0
    %665 = vmatprep.subr.mxu0 0.0
    %666 = vmatpush2.msra.mxu0 0.0
    %667 = vmatprep.subr.mxu0 0.0
    %668 = vmatpush2.msra.mxu0 0.0
    %669 = vmatprep.subr.mxu0 0.0
    %670 = vmatpush2.msra.mxu0 0.0
    %671 = vmatprep.subr.mxu0 0.0
    %672 = vmatpush2.msra.mxu0 0.0
    %673 = vmatprep.subr.mxu0 0.0
    %674 = vmatpush2.msra.mxu0 0.0
    %675 = vmatprep.subr.mxu0 0.0
    %676 = vmatpush2.msra.mxu0 0.0
    %677 = vmatprep.subr.mxu0 0.0
    %678 = vmatpush2.msra.mxu0 0.0
    %679 = vmatprep.subr.mxu0 0.0
    %680 = vmatpush2.msra.mxu0 0.0
    %681 = vmatprep.mubr.f32.mxu0 0.0
    %682 = vmatmul.mubr.f32.gmra.mxu0 %v615
    %v683 = vpop.f32.mrf.mxu0
    %v684 = vadd.f32 %v217, %v683
    %v685 = vpop.f32.mrf.mxu0
    %686 = vdwg.mxu0
    %v688 = vrot.slane %v684, 3
    %v690 = vadd.f32 %v684, %v458
    %v691 = vadd.f32 %v688, %v459
    %v692 = vsel %vm498, %v690, 0.0
    %v693 = vsel %vm498, %v691, 0.0
    %v696 = vrot.slane %v692, 1
    %v697 = vrot.slane %v693, 1
    %v700 = vmax.f32 %v692, %v696
    %v701 = vmax.f32 %v693, %v697
    %v702 = vrot.slane %v692, 2
    %v703 = vrot.slane %v693, 2
    %v706 = vmax.f32 %v700, %v702
    %v707 = vmax.f32 %v701, %v703
    %v708 = vmax.f32 %v706, 0.0
    %v709 = vmax.f32 %v707, 0.0
    %v712 = vrot.slane %v708, 7
    %v713 = vrot.slane %v709, 7
    %v716 = vsel %vm180, 0.0, %v712
    %v717 = vsel %vm180, 0.0, %v713
    %v718 = vsel %vm167, %v716, 0.0
    %v719 = vsel %vm167, %v717, 0.0
    %v722 = vrot.slane %v718, 1
    %v723 = vrot.slane %v719, 1
    %724 = vrot.lane.b32.xlu0 %v722, 16
    %v725 = vpop.permute.xlu0 %724
    %726 = vrot.lane.b32.xlu0 %v723, 16
    %v727 = vpop.permute.xlu0 %726
    %v730 = vrot.slane %v718, 2
    %v731 = vrot.slane %v719, 2
    %732 = vrot.lane.b32.xlu0 %v730, 32
    %v733 = vpop.permute.xlu0 %732
    %734 = vrot.lane.b32.xlu0 %v731, 32
    %v735 = vpop.permute.xlu0 %734
    %v738 = vsel %vm204, %v718, %v725
    %v739 = vsel %vm204, %v719, %v727
    %v740 = vsel %vm67, %v738, %v733
    %v741 = vsel %vm67, %v739, %v735
    %v743 = vrot.slane %v741, 7
    %v745 = vsel %vm180, %v740, %v743
    %v747 = vsel %vm219, %v745, 0
    %749 = vmatprep.subr.mxu0 0.0
    %750 = vmatpush1.msra.mxu0 0.0
    %751 = vmatprep.subr.mxu0 0.0
    %752 = vmatpush1.msra.mxu0 0.0
    %753 = vmatprep.subr.mxu0 0.0
    %754 = vmatpush1.msra.mxu0 0.0
    %755 = vmatprep.subr.mxu0 0.0
    %756 = vmatpush1.msra.mxu0 0.0
    %757 = vmatprep.subr.mxu0 0.0
    %758 = vmatpush1.msra.mxu0 0.0
    %759 = vmatprep.subr.mxu0 0.0
    %760 = vmatpush1.msra.mxu0 0.0
    %761 = vmatprep.subr.mxu0 0.0
    %762 = vmatpush1.msra.mxu0 0.0
    %763 = vmatprep.subr.mxu0 0.0
    %764 = vmatpush1.msra.mxu0 0.0
    %765 = vmatprep.subr.mxu0 0.0
    %766 = vmatpush1.msra.mxu0 0.0
    %767 = vmatprep.subr.mxu0 0.0
    %768 = vmatpush1.msra.mxu0 0.0
    %769 = vmatprep.subr.mxu0 0.0
    %770 = vmatpush1.msra.mxu0 %v47
    %771 = vmatprep.subr.mxu0 0.0
    %772 = vmatpush1.msra.mxu0 %v46
    %773 = vmatprep.subr.mxu0 0.0
    %774 = vmatpush1.msra.mxu0 %v45
    %775 = vmatprep.subr.mxu0 0.0
    %776 = vmatpush1.msra.mxu0 %v44
    %777 = vmatprep.subr.mxu0 0.0
    %778 = vmatpush1.msra.mxu0 %v43
    %779 = vmatprep.subr.mxu0 0.0
    %780 = vmatpush1.msra.mxu0 %v42
    %781 = vmatprep.subr.mxu0 0.0
    %782 = vmatpush2.msra.mxu0 0.0
    %783 = vmatprep.subr.mxu0 0.0
    %784 = vmatpush2.msra.mxu0 0.0
    %785 = vmatprep.subr.mxu0 0.0
    %786 = vmatpush2.msra.mxu0 0.0
    %787 = vmatprep.subr.mxu0 0.0
    %788 = vmatpush2.msra.mxu0 0.0
    %789 = vmatprep.subr.mxu0 0.0
    %790 = vmatpush2.msra.mxu0 0.0
    %791 = vmatprep.subr.mxu0 0.0
    %792 = vmatpush2.msra.mxu0 0.0
    %793 = vmatprep.subr.mxu0 0.0
    %794 = vmatpush2.msra.mxu0 0.0
    %795 = vmatprep.subr.mxu0 0.0
    %796 = vmatpush2.msra.mxu0 0.0
    %797 = vmatprep.subr.mxu0 0.0
    %798 = vmatpush2.msra.mxu0 0.0
    %799 = vmatprep.subr.mxu0 0.0
    %800 = vmatpush2.msra.mxu0 0.0
    %801 = vmatprep.subr.mxu0 0.0
    %802 = vmatpush2.msra.mxu0 0.0
    %803 = vmatprep.subr.mxu0 0.0
    %804 = vmatpush2.msra.mxu0 0.0
    %805 = vmatprep.subr.mxu0 0.0
    %806 = vmatpush2.msra.mxu0 0.0
    %807 = vmatprep.subr.mxu0 0.0
    %808 = vmatpush2.msra.mxu0 0.0
    %809 = vmatprep.subr.mxu0 0.0
    %810 = vmatpush2.msra.mxu0 0.0
    %811 = vmatprep.subr.mxu0 0.0
    %812 = vmatpush2.msra.mxu0 0.0
    %813 = vmatprep.mubr.f32.mxu0 0.0
    %814 = vmatmul.mubr.f32.gmra.mxu0 %v747
    %v815 = vpop.f32.mrf.mxu0
    %v816 = vadd.f32 %v217, %v815
    %v817 = vpop.f32.mrf.mxu0
    %818 = vdwg.mxu0
    %v820 = vrot.slane %v816, 1
    %v822 = vmax.f32 %v816, 0.0
    %v823 = vmax.f32 %v820, 0.0
    %v826 = vrot.slane %v822, 7
    %v827 = vrot.slane %v823, 7
    %v830 = vsel %vm180, 0.0, %v826
    %v831 = vsel %vm180, 0.0, %v827
    %v832 = vsel %vm167, %v830, 0.0
    %v833 = vsel %vm167, %v831, 0.0
    %v836 = vrot.slane %v832, 1
    %v837 = vrot.slane %v833, 1
    %838 = vrot.lane.b32.xlu0 %v836, 16
    %v839 = vpop.permute.xlu0 %838
    %840 = vrot.lane.b32.xlu0 %v837, 16
    %v841 = vpop.permute.xlu0 %840
    %v844 = vrot.slane %v832, 2
    %v845 = vrot.slane %v833, 2
    %846 = vrot.lane.b32.xlu0 %v844, 32
    %v847 = vpop.permute.xlu0 %846
    %848 = vrot.lane.b32.xlu0 %v845, 32
    %v849 = vpop.permute.xlu0 %848
    %v852 = vsel %vm204, %v832, %v839
    %v853 = vsel %vm204, %v833, %v841
    %v854 = vsel %vm67, %v852, %v847
    %v855 = vsel %vm67, %v853, %v849
    %v857 = vrot.slane %v855, 7
    %v859 = vsel %vm180, %v854, %v857
    %v861 = vsel %vm219, %v859, 0
    %863 = vmatprep.subr.mxu0 0.0
    %864 = vmatpush1.msra.mxu0 0.0
    %865 = vmatprep.subr.mxu0 0.0
    %866 = vmatpush1.msra.mxu0 0.0
    %867 = vmatprep.subr.mxu0 0.0
    %868 = vmatpush1.msra.mxu0 0.0
    %869 = vmatprep.subr.mxu0 0.0
    %870 = vmatpush1.msra.mxu0 0.0
    %871 = vmatprep.subr.mxu0 0.0
    %872 = vmatpush1.msra.mxu0 0.0
    %873 = vmatprep.subr.mxu0 0.0
    %874 = vmatpush1.msra.mxu0 0.0
    %875 = vmatprep.subr.mxu0 0.0
    %876 = vmatpush1.msra.mxu0 0.0
    %877 = vmatprep.subr.mxu0 0.0
    %878 = vmatpush1.msra.mxu0 0.0
    %879 = vmatprep.subr.mxu0 0.0
    %880 = vmatpush1.msra.mxu0 0.0
    %881 = vmatprep.subr.mxu0 0.0
    %882 = vmatpush1.msra.mxu0 0.0
    %883 = vmatprep.subr.mxu0 0.0
    %884 = vmatpush1.msra.mxu0 %v47
    %885 = vmatprep.subr.mxu0 0.0
    %886 = vmatpush1.msra.mxu0 %v46
    %887 = vmatprep.subr.mxu0 0.0
    %888 = vmatpush1.msra.mxu0 %v45
    %889 = vmatprep.subr.mxu0 0.0
    %890 = vmatpush1.msra.mxu0 %v44
    %891 = vmatprep.subr.mxu0 0.0
    %892 = vmatpush1.msra.mxu0 %v43
    %893 = vmatprep.subr.mxu0 0.0
    %894 = vmatpush1.msra.mxu0 %v42
    %895 = vmatprep.subr.mxu0 0.0
    %896 = vmatpush2.msra.mxu0 0.0
    %897 = vmatprep.subr.mxu0 0.0
    %898 = vmatpush2.msra.mxu0 0.0
    %899 = vmatprep.subr.mxu0 0.0
    %900 = vmatpush2.msra.mxu0 0.0
    %901 = vmatprep.subr.mxu0 0.0
    %902 = vmatpush2.msra.mxu0 0.0
    %903 = vmatprep.subr.mxu0 0.0
    %904 = vmatpush2.msra.mxu0 0.0
    %905 = vmatprep.subr.mxu0 0.0
    %906 = vmatpush2.msra.mxu0 0.0
    %907 = vmatprep.subr.mxu0 0.0
    %908 = vmatpush2.msra.mxu0 0.0
    %909 = vmatprep.subr.mxu0 0.0
    %910 = vmatpush2.msra.mxu0 0.0
    %911 = vmatprep.subr.mxu0 0.0
    %912 = vmatpush2.msra.mxu0 0.0
    %913 = vmatprep.subr.mxu0 0.0
    %914 = vmatpush2.msra.mxu0 0.0
    %915 = vmatprep.subr.mxu0 0.0
    %916 = vmatpush2.msra.mxu0 0.0
    %917 = vmatprep.subr.mxu0 0.0
    %918 = vmatpush2.msra.mxu0 0.0
    %919 = vmatprep.subr.mxu0 0.0
    %920 = vmatpush2.msra.mxu0 0.0
    %921 = vmatprep.subr.mxu0 0.0
    %922 = vmatpush2.msra.mxu0 0.0
    %923 = vmatprep.subr.mxu0 0.0
    %924 = vmatpush2.msra.mxu0 0.0
    %925 = vmatprep.subr.mxu0 0.0
    %926 = vmatpush2.msra.mxu0 0.0
    %927 = vmatprep.mubr.f32.mxu0 0.0
    %928 = vmatmul.mubr.f32.gmra.mxu0 %v861
    %v929 = vpop.f32.mrf.mxu0
    %v930 = vadd.f32 %v217, %v929
    %v931 = vpop.f32.mrf.mxu0
    %932 = vdwg.mxu0
    %v934 = vrot.slane %v930, 1
    %v936 = vadd.f32 %v930, %v706
    %v937 = vadd.f32 %v934, %v707
    %v939 = vrot.slane %v937, 7
    %v941 = vsel %vm180, %v936, %v939
    %v942 = vld [vmem:[%s5] sm:$0xff]
    %v943 = vld [vmem:[%s5 + $0x8] sm:$0xff]
    %v944 = vld [vmem:[%s6] sm:$0x1]
    %v946 = vlaneseq
    %v947 = vshrl.u32 %v946, 7
    %v948 = vsub.s32 0, %v947
    %v949 = vrot.slane %v944, %v948
    %v952 = vsel %vm204, %v941, 0
    %954 = vmatprep.subr.mxu0 0.0
    %955 = vmatpush1.msra.mxu0 0.0
    %956 = vmatprep.subr.mxu0 0.0
    %957 = vmatpush1.msra.mxu0 0.0
    %958 = vmatprep.subr.mxu0 0.0
    %959 = vmatpush1.msra.mxu0 0.0
    %960 = vmatprep.subr.mxu0 0.0
    %961 = vmatpush1.msra.mxu0 0.0
    %962 = vmatprep.subr.mxu0 0.0
    %963 = vmatpush1.msra.mxu0 0.0
    %964 = vmatprep.subr.mxu0 0.0
    %965 = vmatpush1.msra.mxu0 0.0
    %966 = vmatprep.subr.mxu0 0.0
    %967 = vmatpush1.msra.mxu0 0.0
    %968 = vmatprep.subr.mxu0 0.0
    %969 = vmatpush1.msra.mxu0 0.0
    %970 = vmatprep.subr.mxu0 0.0
    %971 = vmatpush1.msra.mxu0 0.0
    %972 = vmatprep.subr.mxu0 0.0
    %973 = vmatpush1.msra.mxu0 0.0
    %974 = vmatprep.subr.mxu0 0.0
    %975 = vmatpush1.msra.mxu0 0.0
    %976 = vmatprep.subr.mxu0 0.0
    %977 = vmatpush1.msra.mxu0 0.0
    %978 = vmatprep.subr.mxu0 0.0
    %979 = vmatpush1.msra.mxu0 0.0
    %980 = vmatprep.subr.mxu0 0.0
    %981 = vmatpush1.msra.mxu0 0.0
    %982 = vmatprep.subr.mxu0 0.0
    %983 = vmatpush1.msra.mxu0 %v943
    %984 = vmatprep.subr.mxu0 0.0
    %985 = vmatpush1.msra.mxu0 %v942
    %986 = vmatprep.subr.mxu0 0.0
    %987 = vmatpush2.msra.mxu0 0.0
    %988 = vmatprep.subr.mxu0 0.0
    %989 = vmatpush2.msra.mxu0 0.0
    %990 = vmatprep.subr.mxu0 0.0
    %991 = vmatpush2.msra.mxu0 0.0
    %992 = vmatprep.subr.mxu0 0.0
    %993 = vmatpush2.msra.mxu0 0.0
    %994 = vmatprep.subr.mxu0 0.0
    %995 = vmatpush2.msra.mxu0 0.0
    %996 = vmatprep.subr.mxu0 0.0
    %997 = vmatpush2.msra.mxu0 0.0
    %998 = vmatprep.subr.mxu0 0.0
    %999 = vmatpush2.msra.mxu0 0.0
    %1000 = vmatprep.subr.mxu0 0.0
    %1001 = vmatpush2.msra.mxu0 0.0
    %1002 = vmatprep.subr.mxu0 0.0
    %1003 = vmatpush2.msra.mxu0 0.0
    %1004 = vmatprep.subr.mxu0 0.0
    %1005 = vmatpush2.msra.mxu0 0.0
    %1006 = vmatprep.subr.mxu0 0.0
    %1007 = vmatpush2.msra.mxu0 0.0
    %1008 = vmatprep.subr.mxu0 0.0
    %1009 = vmatpush2.msra.mxu0 0.0
    %1010 = vmatprep.subr.mxu0 0.0
    %1011 = vmatpush2.msra.mxu0 0.0
    %1012 = vmatprep.subr.mxu0 0.0
    %1013 = vmatpush2.msra.mxu0 0.0
    %1014 = vmatprep.subr.mxu0 0.0
    %1015 = vmatpush2.msra.mxu0 0.0
    %1016 = vmatprep.subr.mxu0 0.0
    %1017 = vmatpush2.msra.mxu0 0.0
    %1018 = vmatprep.mubr.f32.mxu0 0.0
    %1019 = vmatmul.mubr.f32.gmra.mxu0 %v952
    %v1020 = vpop.f32.mrf.mxu0
    %v1021 = vadd.f32 %v949, %v1020
    %v1022 = vpop.f32.mrf.mxu0
    %1023 = vdwg.mxu0
    %vm1024 = vcmask 74752
    %1025 = vst.msk [vmem:[#allocation2] sm:$0x3] %vm1024, %v1021
    // Predicated region
    $region30: #{tpu_custom_call.1} parent=1 // pred_check
      _
    $region31: #{tpu_custom_call.1} parent=1 // pred_check_branch
      %1027 = sbr.rel (0) target = $region33
    $region32: #{tpu_custom_call.1} parent=1 // pred_region
      %s1029 = ssub.s32 32, 32
      %1030 = vsyncadd [#allocation3], %s1029
      %s1032 = sshll.u32 [#allocation2], 4
      %s1033 = int_to_ptr.vmem [resolvable:$true] %s1032
      %1035 = dma.vmem_to_hbm [thread:$0]  %s1033, 32, %s7, [#allocation3]
    $region33: #{tpu_custom_call.1} parent=1 // pred_fallthru
      _
    // Predicated region
    $region34: #{tpu_custom_call.1} parent=1 // pred_check
      _
    $region35: #{tpu_custom_call.1} parent=1 // pred_check_branch
      %1037 = sbr.rel (0) target = $region37
    $region36: #{tpu_custom_call.1} parent=1 // pred_region
      %1038 = dma.done [#allocation3], 32
    $region37: #{tpu_custom_call.1} parent=1 // pred_fallthru
      _
    %1039 = vsyncpa [#allocation3], 1

</llo_original>
